<compile_context>
chip_gen: v5e
topology: v5e:2x2
jax: 0.10.0
libtpu: 0.0.40
codegen_flags: <defaults>
</compile_context>

<pallas_src>
import jax
import jax.numpy as jnp
from jax import lax
from jax.experimental import pallas as pl
from jax.experimental.pallas import tpu as pltpu


def _sublane_granularity(dtype) -> int:
    itemsize = jnp.dtype(dtype).itemsize
    if itemsize == 2:
        return 16
    if itemsize == 1:
        return 32
    return 8


def _pick_tile_n(n: int, c: int, dtype) -> int:
    """Biggest batch tile that keeps the double-buffered DMA footprint small."""
    itemsize = jnp.dtype(dtype).itemsize
    try:
        vmem_bytes = int(pltpu.get_tpu_info().vmem_capacity_bytes)
    except Exception:  # pragma: no cover - conservative fallback
        vmem_bytes = 64 * 1024 * 1024
    budget = vmem_bytes // 8                    # generous headroom under scoped limit
    per_row = 2 * 2 * c * itemsize              # 2 inputs x double buffered
    sub = _sublane_granularity(dtype)
    tile = budget // max(per_row, 1)
    tile = max(sub, min(1024, (tile // sub) * sub))
    if tile >= n:
        return n                                 # single tile: block == full array dim
    return tile


def _make_kernel(threshold: float, n_total: int, tile_n: int, c: int, inv_n: float):
    def kernel(weak_ref, strong_ref, out_ref):
        i = pl.program_id(0)

        @pl.when(i == 0)
        def _():
            out_ref[...] = jnp.zeros_like(out_ref)

        weak = weak_ref[...].astype(jnp.float32)      # (TILE_N, C)
        strong = strong_ref[...].astype(jnp.float32)  # (TILE_N, C)

        # --- pseudo-label confidence from weak branch (stable softmax max) ---
        w_max = jnp.max(weak, axis=1, keepdims=True)                        # (T,1)
        w_lse = w_max + jnp.log(
            jnp.sum(jnp.exp(weak - w_max), axis=1, keepdims=True))          # (T,1)
        max_prob = jnp.exp(w_max - w_lse)                                   # (T,1)

        # --- argmax along class axis (first occurrence on ties) ---
        col = lax.broadcasted_iota(jnp.int32, (tile_n, c), 1)               # (T,C)
        is_max = weak == w_max
        label = jnp.min(jnp.where(is_max, col, c), axis=1, keepdims=True)   # (T,1)

        # --- cross entropy of strong branch vs pseudo-label ---
        s_max = jnp.max(strong, axis=1, keepdims=True)
        s_lse = s_max + jnp.log(
            jnp.sum(jnp.exp(strong - s_max), axis=1, keepdims=True))        # (T,1)
        s_at_label = jnp.sum(
            jnp.where(col == label, strong, 0.0), axis=1, keepdims=True)    # (T,1)
        ce = s_lse - s_at_label                                             # (T,1)

        # --- confidence mask, padded-row mask, partial-sum accumulation ---
        row = lax.broadcasted_iota(jnp.int32, (tile_n, 1), 0)               # (T,1)
        valid = (row + i * tile_n) < n_total
        select = jnp.logical_and(max_prob > threshold, valid)
        partial = jnp.sum(jnp.where(select, ce, 0.0))                       # scalar

        out_ref[...] += partial.reshape(1, 1)

        @pl.when(i == pl.num_programs(0) - 1)
        def _():
            out_ref[...] = out_ref[...] * jnp.float32(inv_n)

    return kernel


def fixmatch_loss(weak: jax.Array, strong: jax.Array, t: float = 0.95,
                  tile_n: int | None = None) -> jax.Array:
    """Pallas implementation of FixMatchLoss.forward. weak/strong: (N, C)."""
    assert weak.shape == strong.shape and weak.ndim == 2
    n, c = weak.shape
    itemsize = jnp.dtype(weak.dtype).itemsize

    if tile_n is None:
        tile_n = _pick_tile_n(n, c, weak.dtype)
    tile_n = min(tile_n, n) if tile_n >= n else tile_n
    num_tiles = pl.cdiv(n, tile_n)

    inv_n = 1.0 / float(n)
    kernel = _make_kernel(float(t), n, tile_n, c, inv_n)

    # VMEM budget: 2 inputs x 2 pipeline buffers per tile, plus slack.
    footprint = 2 * 2 * tile_n * c * itemsize
    vmem_limit = int(min(max(2 * footprint + (2 << 20), 16 << 20), 48 << 20))

    cost = pl.CostEstimate(
        flops=10 * n * c,
        transcendentals=2 * n * c + 2 * n,
        bytes_accessed=2 * n * c * itemsize + 4,
    )

    out = pl.pallas_call(
        kernel,
        out_shape=jax.ShapeDtypeStruct((1, 1), jnp.float32),
        grid=(num_tiles,),
        in_specs=[
            pl.BlockSpec((tile_n, c), lambda i: (i, 0)),
            pl.BlockSpec((tile_n, c), lambda i: (i, 0)),
        ],
        out_specs=pl.BlockSpec((1, 1), lambda i: (0, 0)),
        compiler_params=pltpu.CompilerParams(
            dimension_semantics=("arbitrary",),   # scalar accumulator carried over tiles
            vmem_limit_bytes=vmem_limit,
        ),
        cost_estimate=cost,
    )(weak, strong)
    return out[0, 0]


def _fixmatch_loss_ref(weak, strong, t=0.95):
    """Pure-JAX reference mirroring the PyTorch module."""
    weak_prob = jax.nn.softmax(weak.astype(jnp.float32), axis=1)
    label = jnp.argmax(weak_prob, axis=1)
    lse = jax.nn.logsumexp(strong.astype(jnp.float32), axis=1)
    ce = lse - jnp.take_along_axis(
        strong.astype(jnp.float32), label[:, None], axis=1)[:, 0]
    mask = (jnp.max(weak_prob, axis=1) > t).astype(jnp.float32)
    return jnp.mean(ce * mask)


if __name__ == "__main__":
    key = jax.random.PRNGKey(0)
    k1, k2, k3, k4 = jax.random.split(key, 4)

    # Case 1: small single-tile shape (batch=8, classes=16).
    N, C = 8, 16
    weak = 6.0 * jax.random.normal(k1, (N, C), dtype=jnp.float32)
    strong = jax.random.normal(k2, (N, C), dtype=jnp.float32)

    loss = fixmatch_loss(weak, strong, t=0.95)
    jax.block_until_ready(loss)
    ref = _fixmatch_loss_ref(weak, strong, t=0.95)
    assert jnp.allclose(loss, ref, atol=1e-5, rtol=1e-5), (loss, ref)

    # Case 2: multi-tile path with a ragged last tile (N not a multiple of
    # TILE_N) to exercise the accumulator + padded-row masking.
    N2, C2 = 20, 16
    weak2 = 6.0 * jax.random.normal(k3, (N2, C2), dtype=jnp.float32)
    strong2 = jax.random.normal(k4, (N2, C2), dtype=jnp.float32)

    loss2 = fixmatch_loss(weak2, strong2, t=0.95, tile_n=8)
    jax.block_until_ready(loss2)
    ref2 = _fixmatch_loss_ref(weak2, strong2, t=0.95)
    assert jnp.allclose(loss2, ref2, atol=1e-5, rtol=1e-5), (loss2, ref2)

    print("KERNEL_OK")
</pallas_src>

<mosaic_0001>
module attributes {stable_mosaic.version = 11 : i64} {
  func.func @kernel(%arg0: i32, %arg1: memref<8x16xf32, #tpu.memory_space<vmem>>, %arg2: memref<8x16xf32, #tpu.memory_space<vmem>>, %arg3: memref<1x1xf32, #tpu.memory_space<vmem>>) attributes {dimension_semantics = [#tpu.dimension_semantics<arbitrary>], iteration_bounds = array<i64: 1>, scalar_prefetch = 0 : i64, scratch_operands = 0 : i64, tpu.core_type = #tpu.core_type<tc>, window_params = [{transform_indices = @transform_0, window_bounds = array<i64: 8, 16>}, {transform_indices = @transform_1, window_bounds = array<i64: 8, 16>}, {pipeline_mode = #tpu.pipeline_mode<synchronous>, transform_indices = @transform_2, window_bounds = array<i64: 1, 1>}]} {
    %c0_i32 = arith.constant 0 : i32
    %0 = arith.cmpi eq, %arg0, %c0_i32 : i32
    %1 = arith.extui %0 : i1 to i32
    %c0_i32_0 = arith.constant 0 : i32
    %2 = arith.cmpi ne, %1, %c0_i32_0 : i32
    scf.if %2 {
      %cst_20 = arith.constant 0.000000e+00 : f32
      %61 = vector.broadcast %cst_20 : f32 to vector<1x1xf32>
      %c0_21 = arith.constant 0 : index
      %c0_22 = arith.constant 0 : index
      %62 = vector.load %arg3[%c0_21, %c0_22] : memref<1x1xf32, #tpu.memory_space<vmem>>, vector<1x1xf32>
      tpu.vector_store %arg3[%c0_21, %c0_22], %61 {strides = array<i32>} : memref<1x1xf32, #tpu.memory_space<vmem>>, vector<1x1xf32>,
    } else {
    }
    %c0 = arith.constant 0 : index
    %c0_1 = arith.constant 0 : index
    %3 = vector.load %arg1[%c0, %c0_1] : memref<8x16xf32, #tpu.memory_space<vmem>>, vector<8x16xf32>
    %c0_2 = arith.constant 0 : index
    %c0_3 = arith.constant 0 : index
    %4 = vector.load %arg2[%c0_2, %c0_3] : memref<8x16xf32, #tpu.memory_space<vmem>>, vector<8x16xf32>
    %cst = arith.constant dense<0xFF800000> : vector<8xf32>
    %5 = vector.multi_reduction <maximumf>, %3, %cst [1] : vector<8x16xf32> to vector<8xf32>
    %6 = vector.shape_cast %5 : vector<8xf32> to vector<8x1xf32>
    %7 = vector.broadcast %6 : vector<8x1xf32> to vector<8x16xf32>
    %8 = arith.subf %3, %7 : vector<8x16xf32>
    %9 = math.exp %8 : vector<8x16xf32>
    %cst_4 = arith.constant dense<0.000000e+00> : vector<8xf32>
    %10 = vector.multi_reduction <add>, %9, %cst_4 [1] : vector<8x16xf32> to vector<8xf32>
    %11 = vector.shape_cast %10 : vector<8xf32> to vector<8x1xf32>
    %12 = math.log %11 : vector<8x1xf32>
    %13 = arith.addf %6, %12 : vector<8x1xf32>
    %14 = arith.subf %6, %13 : vector<8x1xf32>
    %15 = math.exp %14 : vector<8x1xf32>
    %16 = tpu.iota {dimensions = array<i32: 1>} : vector<8x16xi32>
    %17 = vector.broadcast %6 : vector<8x1xf32> to vector<8x16xf32>
    %18 = arith.cmpf oeq, %3, %17 : vector<8x16xf32>
    %c16_i32 = arith.constant 16 : i32
    %19 = vector.broadcast %c16_i32 : i32 to vector<8x16xi32>
    %20 = arith.select %18, %16, %19 : vector<8x16xi1>, vector<8x16xi32>
    %cst_5 = arith.constant dense<2147483647> : vector<8xi32>
    %21 = vector.multi_reduction <minsi>, %20, %cst_5 [1] : vector<8x16xi32> to vector<8xi32>
    %22 = vector.shape_cast %21 : vector<8xi32> to vector<8x1xi32>
    %cst_6 = arith.constant dense<0xFF800000> : vector<8xf32>
    %23 = vector.multi_reduction <maximumf>, %4, %cst_6 [1] : vector<8x16xf32> to vector<8xf32>
    %24 = vector.shape_cast %23 : vector<8xf32> to vector<8x1xf32>
    %25 = vector.broadcast %24 : vector<8x1xf32> to vector<8x16xf32>
    %26 = arith.subf %4, %25 : vector<8x16xf32>
    %27 = math.exp %26 : vector<8x16xf32>
    %cst_7 = arith.constant dense<0.000000e+00> : vector<8xf32>
    %28 = vector.multi_reduction <add>, %27, %cst_7 [1] : vector<8x16xf32> to vector<8xf32>
    %29 = vector.shape_cast %28 : vector<8xf32> to vector<8x1xf32>
    %30 = math.log %29 : vector<8x1xf32>
    %31 = arith.addf %24, %30 : vector<8x1xf32>
    %32 = vector.broadcast %22 : vector<8x1xi32> to vector<8x16xi32>
    %33 = arith.cmpi eq, %16, %32 : vector<8x16xi32>
    %cst_8 = arith.constant 0.000000e+00 : f32
    %34 = vector.broadcast %cst_8 : f32 to vector<8x16xf32>
    %35 = arith.select %33, %4, %34 : vector<8x16xi1>, vector<8x16xf32>
    %cst_9 = arith.constant dense<0.000000e+00> : vector<8xf32>
    %36 = vector.multi_reduction <add>, %35, %cst_9 [1] : vector<8x16xf32> to vector<8xf32>
    %37 = vector.shape_cast %36 : vector<8xf32> to vector<8x1xf32>
    %38 = arith.subf %31, %37 : vector<8x1xf32>
    %39 = tpu.iota {dimensions = array<i32: 0>} : vector<8x1xi32>
    %c8_i32 = arith.constant 8 : i32
    %40 = arith.muli %arg0, %c8_i32 : i32
    %41 = vector.broadcast %40 : i32 to vector<8x1xi32>
    %42 = arith.addi %39, %41 : vector<8x1xi32>
    %c8_i32_10 = arith.constant 8 : i32
    %43 = vector.broadcast %c8_i32_10 : i32 to vector<8x1xi32>
    %44 = arith.cmpi slt, %42, %43 : vector<8x1xi32>
    %cst_11 = arith.constant 0.949999988 : f32
    %45 = vector.broadcast %cst_11 : f32 to vector<8x1xf32>
    %46 = arith.cmpf ogt, %15, %45 : vector<8x1xf32>
    %47 = arith.andi %46, %44 : vector<8x1xi1>
    %cst_12 = arith.constant 0.000000e+00 : f32
    %48 = vector.broadcast %cst_12 : f32 to vector<8x1xf32>
    %49 = arith.select %47, %38, %48 : vector<8x1xi1>, vector<8x1xf32>
    %50 = vector.shape_cast %49 : vector<8x1xf32> to vector<1x8x1xf32>
    %cst_13 = arith.constant dense<0.000000e+00> : vector<1xf32>
    %51 = vector.multi_reduction <add>, %50, %cst_13 [1, 2] : vector<1x8x1xf32> to vector<1xf32>
    %52 = vector.shape_cast %51 : vector<1xf32> to vector<1x1x1xf32>
    %53 = vector.extract %52[0, 0, 0] : f32 from vector<1x1x1xf32>
    %c0_14 = arith.constant 0 : index
    %c0_15 = arith.constant 0 : index
    %54 = vector.load %arg3[%c0_14, %c0_15] : memref<1x1xf32, #tpu.memory_space<vmem>>, vector<1x1xf32>
    %55 = vector.broadcast %53 : f32 to vector<1x1xf32>
    %56 = arith.addf %54, %55 : vector<1x1xf32>
    %c0_16 = arith.constant 0 : index
    %c0_17 = arith.constant 0 : index
    %57 = vector.load %arg3[%c0_16, %c0_17] : memref<1x1xf32, #tpu.memory_space<vmem>>, vector<1x1xf32>
    tpu.vector_store %arg3[%c0_16, %c0_17], %56 {strides = array<i32>} : memref<1x1xf32, #tpu.memory_space<vmem>>, vector<1x1xf32>,
    %c0_i32_18 = arith.constant 0 : i32
    %58 = arith.cmpi eq, %arg0, %c0_i32_18 : i32
    %59 = arith.extui %58 : i1 to i32
    %c0_i32_19 = arith.constant 0 : i32
    %60 = arith.cmpi ne, %59, %c0_i32_19 : i32
    scf.if %60 {
      %c0_20 = arith.constant 0 : index
      %c0_21 = arith.constant 0 : index
      %61 = vector.load %arg3[%c0_20, %c0_21] : memref<1x1xf32, #tpu.memory_space<vmem>>, vector<1x1xf32>
      %cst_22 = arith.constant 1.250000e-01 : f32
      %62 = vector.broadcast %cst_22 : f32 to vector<1x1xf32>
      %63 = arith.mulf %61, %62 : vector<1x1xf32>
      %c0_23 = arith.constant 0 : index
      %c0_24 = arith.constant 0 : index
      %64 = vector.load %arg3[%c0_23, %c0_24] : memref<1x1xf32, #tpu.memory_space<vmem>>, vector<1x1xf32>
      tpu.vector_store %arg3[%c0_23, %c0_24], %63 {strides = array<i32>} : memref<1x1xf32, #tpu.memory_space<vmem>>, vector<1x1xf32>,
    } else {
    }
    return
  }
  func.func @transform_0(%arg0: i32) -> (i32, i32) {
    %c0_i32 = arith.constant 0 : i32
    %c0_i32_0 = arith.constant 0 : i32
    return %arg0, %c0_i32 : i32, i32
  }
  func.func @transform_1(%arg0: i32) -> (i32, i32) {
    %c0_i32 = arith.constant 0 : i32
    %c0_i32_0 = arith.constant 0 : i32
    return %arg0, %c0_i32 : i32, i32
  }
  func.func @transform_2(%arg0: i32) -> (i32, i32) {
    %c0_i32 = arith.constant 0 : i32
    %c0_i32_0 = arith.constant 0 : i32
    %c0_i32_1 = arith.constant 0 : i32
    return %c0_i32, %c0_i32_0 : i32, i32
  }
}

</mosaic_0001>

<llo_original>
// kernel: tpu_custom_call.1
$region0: #{tpu_custom_call.1}
  #allocation0 [shape = 'u32[]', space=smem, size = 0x4, offset = 0x4, fixed_abs, tag = 'smem constant byte address 0x4 - core index']
  #allocation1 [shape = 'u32[72,128]{1,0:T(1,128)}', space=vmem, size = 0x9000, scoped, tag = 'internal scratch']
  %s0 = inlined_call_operand.hbm [shape: f32[8,16], index: 0, kind: input, shape index: {}]
  %s1 = inlined_call_operand.hbm [shape: f32[8,16], index: 1, kind: input, shape index: {}]
  %s2 = inlined_call_operand.hbm [shape: f32[1,1], index: 2, kind: output, shape index: {}]
  %s3 = sld [smem:[#allocation0]]
  $region34: #{tpu_custom_call.1} parent=0
    _
  %s5 = ssub.s32 1, %s3
  %s6 = scalar_select 0, %s5, %s3
  $region1: #{tpu_custom_call.1} parent=0
    #allocation2 [shape = 'u8[4096]{0}', space=vmem, size = 0x1000, scoped, tag = 'input window, operand 0, single buffered']
    #allocation3 [shape = 's32[1]{0}', space=sflag, size = 0x4, scoped, tag = 'scoped memory for tpu_custom_call.1']
    #allocation4 [shape = 's32[1]{0}', space=sflag, size = 0x4, scoped, tag = 'scoped memory for tpu_custom_call.1']
    #allocation5 [shape = 'u8[4096]{0}', space=vmem, size = 0x1000, scoped, tag = 'input window, operand 1, single buffered']
    #allocation6 [shape = 's32[1]{0}', space=sflag, size = 0x4, scoped, tag = 'scoped memory for tpu_custom_call.1']
    #allocation7 [shape = 'u8[512]{0}', space=vmem, size = 0x400, scoped, tag = 'output window, operand 0, single buffered']
    %7 = vsyncpa [#allocation3], 0
    %8 = vsyncpa [#allocation6], 0
    %9 = vsyncpa [#allocation4], 0
    // Predicated region
    $region2: #{tpu_custom_call.1} parent=1 // pred_check
      _
    $region3: #{tpu_custom_call.1} parent=1 // pred_check_branch
      %11 = sbr.rel (0) target = $region5
    $region4: #{tpu_custom_call.1} parent=1 // pred_region
      %13 = vsyncadd [#allocation3], 0
      %s15 = sshll.u32 %s0, 4
      %s16 = int_to_ptr.hbm [resolvable:$true] %s15
      %s17 = sshll.u32 [#allocation2], 4
      %s18 = int_to_ptr.vmem [resolvable:$true] %s17
      %20 = dma.hbm_to_vmem [thread:$0]  %s16, 128, %s18, [#allocation3]
    $region5: #{tpu_custom_call.1} parent=1 // pred_fallthru
      _
    // Predicated region
    $region6: #{tpu_custom_call.1} parent=1 // pred_check
      _
    $region7: #{tpu_custom_call.1} parent=1 // pred_check_branch
      %22 = sbr.rel (0) target = $region9
    $region8: #{tpu_custom_call.1} parent=1 // pred_region
      %24 = vsyncadd [#allocation6], 0
      %s26 = sshll.u32 %s1, 4
      %s27 = int_to_ptr.hbm [resolvable:$true] %s26
      %s28 = sshll.u32 [#allocation5], 4
      %s29 = int_to_ptr.vmem [resolvable:$true] %s28
      %31 = dma.hbm_to_vmem [thread:$0]  %s27, 128, %s29, [#allocation6]
    $region9: #{tpu_custom_call.1} parent=1 // pred_fallthru
      _
    // Predicated region
    $region10: #{tpu_custom_call.1} parent=1 // pred_check
      _
    $region11: #{tpu_custom_call.1} parent=1 // pred_check_branch
      %33 = sbr.rel (0) target = $region13
    $region12: #{tpu_custom_call.1} parent=1 // pred_region
      %35 = dma.done [#allocation3], 128
    $region13: #{tpu_custom_call.1} parent=1 // pred_fallthru
      _
    // Predicated region
    $region14: #{tpu_custom_call.1} parent=1 // pred_check
      _
    $region15: #{tpu_custom_call.1} parent=1 // pred_check_branch
      %37 = sbr.rel (0) target = $region17
    $region16: #{tpu_custom_call.1} parent=1 // pred_region
      %39 = dma.done [#allocation6], 128
    $region17: #{tpu_custom_call.1} parent=1 // pred_fallthru
      _
    %p40 = scmp.eq.s32.totalorder 0, 0
    // Predicated region
    $region18: #{tpu_custom_call.1} parent=1 // pred_check
      %p41 = pneg %p40
    $region19: #{tpu_custom_call.1} parent=1 // pred_check_branch
      %43 = sbr.rel (%p41) target = $region21
    $region20: #{tpu_custom_call.1} parent=1 // pred_region
      %vm44 = vcmask 0
      %45 = vst.msk [vmem:[#allocation7] sm:$0x1] %vm44, 0.0
    $region21: #{tpu_custom_call.1} parent=1 // pred_fallthru
      _
    %v46 = vld [vmem:[#allocation2] sm:$0xff]
    %v47 = vld [vmem:[#allocation5] sm:$0xff]
    %vm48 = vcmask 130048
    %v49 = vsel %vm48, %v46, -inf
    %50 = vmax.xlane.f32.xlu0 %v49
    %v51 = vpop.xlane.xlu0 %50
    %v52 = vsub.f32 %v46, %v51
    %v53 = vmul.f32 %v52, 1.442695
    %v54 = vpow.pop %v53
    %v55 = vsel %vm48, %v54, 0.0
    %56 = vadd.xlane.f32.xlu0 %v55
    %v57 = vpop.xlane.xlu0 %56
    %v58 = vlog2.pop %v57
    %v59 = vmul.f32 %v58, 0.6931472
    %v60 = vadd.f32 %v51, %v59
    %v61 = vsub.f32 %v51, %v60
    %v62 = vmul.f32 %v61, 1.442695
    %v63 = vpow.pop %v62
    %v64 = vlaneseq
    %v65 = vand.u32 %v64, 127
    %vm66 = vcmp.eq.f32.partialorder %v46, %v51
    %v67 = vsel %vm66, %v65, 16
    %v68 = vsel %vm48, %v67, 2147483647
    %v69 = vand.u32 %v68, 65535
    %v70 = vshra.s32 %v68, 16
    %v71 = vcvt.s32.f32 %v69
    %v72 = vcvt.s32.f32 %v70
    %73 = vmin.xlane.f32.xlu0 %v72
    %v74 = vpop.xlane.xlu0 %73
    %vm75 = vcmp.eq.f32.partialorder %v72, %v74
    %v76 = vsel %vm75, %v71, inf
    %77 = vmin.xlane.f32.xlu0 %v76
    %v78 = vpop.xlane.xlu0 %77
    %v79 = vcvt.f32.s32 %v78
    %v80 = vcvt.f32.s32 %v74
    %v81 = vshll.u32 %v80, 16
    %v82 = vadd.s32 %v81, %v79
    %v83 = vsel %vm48, %v47, -inf
    %84 = vmax.xlane.f32.xlu0 %v83
    %v85 = vpop.xlane.xlu0 %84
    %v86 = vsub.f32 %v47, %v85
    %v87 = vmul.f32 %v86, 1.442695
    %v88 = vpow.pop %v87
    %v89 = vsel %vm48, %v88, 0.0
    %90 = vadd.xlane.f32.xlu0 %v89
    %v91 = vpop.xlane.xlu0 %90
    %v92 = vlog2.pop %v91
    %v93 = vmul.f32 %v92, 0.6931472
    %v94 = vadd.f32 %v85, %v93
    %vm95 = vcmp.eq.s32.totalorder %v65, %v82
    %v96 = vsel %vm95, %v47, 0.0
    %v97 = vsel %vm48, %v96, 0.0
    %98 = vadd.xlane.f32.xlu0 %v97
    %v99 = vpop.xlane.xlu0 %98
    %v100 = vsub.f32 %v94, %v99
    %v101 = vlaneseq
    %v102 = vshrl.u32 %v101, 7
    %s103 = smul.u32 0, 8
    %v104 = vstv %s103
    %v105 = vadd.s32 %v102, %v104
    %vm106 = vcmp.lt.s32.totalorder %v105, 8
    %vm107 = vcmp.gt.f32.partialorder %v63, 0.95
    %vm108 = vmand %vm107, %vm106
    %v109 = vsel %vm108, %v100, 0.0
    %vm110 = vcmask 7168
    %v111 = vsel %vm110, %v109, 0.0
    %112 = vadd.xlane.f32.xlu0 %v111
    %v113 = vpop.xlane.xlu0 %112
    %v114 = vrot.slane %v113, 4
    %v115 = vadd.f32 %v113, %v114
    %v116 = vrot.slane %v115, 2
    %v117 = vadd.f32 %v115, %v116
    %v118 = vrot.slane %v117, 1
    %v119 = vadd.f32 %v117, %v118
    %s120 = vtos %v119
    %v121 = vld [vmem:[#allocation7] sm:$0x1]
    %v122 = vstv %s120
    %v123 = vadd.f32 %v121, %v122
    %vm124 = vcmask 0
    %125 = vst.msk [vmem:[#allocation7] sm:$0x1] %vm124, %v123
    // Predicated region
    $region22: #{tpu_custom_call.1} parent=1 // pred_check
      %p126 = pneg %p40
    $region23: #{tpu_custom_call.1} parent=1 // pred_check_branch
      %128 = sbr.rel (%p126) target = $region25
    $region24: #{tpu_custom_call.1} parent=1 // pred_region
      %v129 = vld [vmem:[#allocation7] sm:$0x1]
      %v130 = vmul.f32 %v129, 0.125
      %131 = vst.msk [vmem:[#allocation7] sm:$0x1] %vm124, %v130
    $region25: #{tpu_custom_call.1} parent=1 // pred_fallthru
      _
    // Predicated region
    $region26: #{tpu_custom_call.1} parent=1 // pred_check
      _
    $region27: #{tpu_custom_call.1} parent=1 // pred_check_branch
      %133 = sbr.rel (0) target = $region29
    $region28: #{tpu_custom_call.1} parent=1 // pred_region
      %135 = vsyncadd [#allocation4], 0
      %s137 = sshll.u32 [#allocation7], 4
      %s138 = int_to_ptr.vmem [resolvable:$true] %s137
      %s139 = sshll.u32 %s2, 4
      %s140 = int_to_ptr.hbm [resolvable:$true] %s139
      %142 = dma.vmem_to_hbm [thread:$0]  %s138, 16, %s140, [#allocation4]
    $region29: #{tpu_custom_call.1} parent=1 // pred_fallthru
      _
    // Predicated region
    $region30: #{tpu_custom_call.1} parent=1 // pred_check
      _
    $region31: #{tpu_custom_call.1} parent=1 // pred_check_branch
      %144 = sbr.rel (0) target = $region33
    $region32: #{tpu_custom_call.1} parent=1 // pred_region
      %146 = dma.done [#allocation4], 16
    $region33: #{tpu_custom_call.1} parent=1 // pred_fallthru
      _
    %147 = vsyncpa [#allocation3], 1
    %148 = vsyncpa [#allocation6], 1
    %149 = vsyncpa [#allocation4], 1

</llo_original>
